<compile_context>
chip_gen: v7x
topology: tpu7x:2x2x1
jax: 0.10.0
libtpu: 0.0.40
codegen_flags: <defaults>
</compile_context>

<pallas_src>
import functools

import jax
import jax.numpy as jnp
import numpy as np
from jax.experimental import pallas as pl
from jax.experimental.pallas import tpu as pltpu


# ----------------------------------------------------------------------------
# Kernel body
# ----------------------------------------------------------------------------
def se_kernel(x_ref, w1t_ref, b1_ref, w2t_ref, b2_ref, o_ref, *, channels_last):
    # channels_last=False : x_ref / o_ref are (Bt, C, HW)  (HW on lanes)
    # channels_last=True  : x_ref / o_ref are (Bt, HW, C)  (C on lanes)
    # w1t_ref: (C, Crp)   fc1 weight, pre-transposed (in, out), Cr padded to 128
    # b1_ref : (1, Crp)   fc1 bias (row vector, zero-padded)
    # w2t_ref: (Crp, C)   fc2 weight, pre-transposed (in, out)
    # b2_ref : (1, C)     fc2 bias (row vector)
    x = x_ref[...]

    # Squeeze: global average pool over the spatial axis, fp32 accumulation.
    spatial_axis = 1 if channels_last else 2
    pooled = jnp.mean(x, axis=spatial_axis, dtype=jnp.float32)          # (Bt, C)

    # Excitation, batched over the whole block: Linear -> ReLU -> Linear -> Sigmoid.
    h = jnp.dot(pooled, w1t_ref[...],
                preferred_element_type=jnp.float32) + b1_ref[...]       # (Bt, Crp)
    h = jnp.maximum(h, 0.0)
    y = jnp.dot(h, w2t_ref[...],
                preferred_element_type=jnp.float32) + b2_ref[...]       # (Bt, C)
    gate = jax.nn.sigmoid(y).astype(x.dtype)                            # (Bt, C)

    # Scale: broadcast channel gates over all spatial positions in x's dtype.
    if channels_last:
        o_ref[...] = (x * gate[:, None, :]).astype(o_ref.dtype)
    else:
        o_ref[...] = (x * gate[:, :, None]).astype(o_ref.dtype)


# ----------------------------------------------------------------------------
# Generation-aware sizing helpers
# ----------------------------------------------------------------------------
def _tpu_vmem_and_cores():
    """Best-effort (per-core VMEM bytes, TensorCores per chip)."""
    vmem_cap = None
    try:
        info = pltpu.get_tpu_info()
        vmem_cap = int(getattr(info, "vmem_capacity_bytes"))
    except Exception:
        vmem_cap = None
    if not vmem_cap or vmem_cap <= 0:
        vmem_cap = 64 << 20  # conservative: assume v7x-sized VMEM
    # Heuristic: 64 MiB per-core VMEM => v7x-class chip with 2 TensorCores;
    # 128 MiB => v5e/v6e with a single TensorCore.
    num_tc = 2 if vmem_cap <= (64 << 20) else 1
    return vmem_cap, num_tc


def _target_block_bytes(vmem_cap):
    """Per-slab target: bigger on 128-MiB chips, smaller on 64-MiB v7x cores."""
    if vmem_cap <= (64 << 20):
        return 8 << 20       # v7x: 4x8 = 32 MiB of double-buffered in+out
    return 14 << 20          # v5e/v6e: 4x14 = 56 MiB, ample within 128 MiB


def _choose_batch_block(B, per_elem_bytes, max_block_bytes, num_tc):
    """Largest divisor of B whose slab fits; on 2-TC chips prefer even grids."""
    cap = max(1, max_block_bytes // max(per_elem_bytes, 1))
    divisors = [d for d in range(1, B + 1) if B % d == 0]
    fitting = [d for d in divisors if d <= cap] or [1]
    if num_tc >= 2 and B >= 2:
        even = [d for d in fitting if (B // d) >= 2 and (B // d) % 2 == 0]
        if even:
            return max(even)          # balanced megacore split
        multi = [d for d in fitting if (B // d) >= 2]
        if multi:
            return max(multi)         # at least give both cores work
    return max(fitting)               # single TC: fewest, largest steps


def _resident_spec(shape):
    """Constant-index-map weight spec, single-buffered when supported."""
    try:
        return pl.BlockSpec(shape, lambda b: (0, 0), pipeline_mode=pl.Buffered(1))
    except Exception:
        return pl.BlockSpec(shape, lambda b: (0, 0))


# ----------------------------------------------------------------------------
# Wrapper
# ----------------------------------------------------------------------------
def se_block(x_nchw, w1, b1, w2, b2):
    """x_nchw: (B, C, H, W). Weights in PyTorch nn.Linear convention (out, in)."""
    B, C, H, W = x_nchw.shape
    HW = H * W
    Cr = w1.shape[0]

    # Pad hidden width to a full lane multiple (zero weights/bias -> exact no-op).
    Crp = max(128, ((Cr + 127) // 128) * 128)
    pad = Crp - Cr
    w1t = jnp.pad(w1.T, ((0, 0), (0, pad)))                 # (C, Crp)
    b1r = jnp.pad(b1.reshape(1, Cr), ((0, 0), (0, pad)))    # (1, Crp)
    w2t = jnp.pad(w2.T, ((0, pad), (0, 0)))                 # (Crp, C)
    b2r = b2.reshape(1, C)                                  # (1, C)

    # Layout: keep HW on lanes when it is already lane-dense; otherwise, if C is
    # lane-dense (typical deeper SE stages: 7x7/14x14 spatial, C in 128..2048),
    # go channels-last for unmasked stores and a relayout-free gate broadcast.
    channels_last = (HW % 128 != 0) and (C % 128 == 0)
    if channels_last:
        x_flat = jnp.transpose(x_nchw, (0, 2, 3, 1)).reshape(B, HW, C)
        block_tail = (HW, C)
    else:
        x_flat = x_nchw.reshape(B, C, HW)
        block_tail = (C, HW)

    per_elem_bytes = C * HW * x_flat.dtype.itemsize
    weight_bytes = sum(int(a.size) * a.dtype.itemsize for a in (w1t, b1r, w2t, b2r))

    vmem_cap, num_tc = _tpu_vmem_and_cores()
    budget = (vmem_cap * 3) // 4              # never request the whole VMEM
    slack = 2 << 20
    # Largest slab that still fits double-buffered in+out plus weights.
    max_block_bytes = max(per_elem_bytes, (budget - 2 * weight_bytes - slack) // 4)
    target = min(_target_block_bytes(vmem_cap), max_block_bytes)

    Bt = _choose_batch_block(B, per_elem_bytes, target, num_tc)
    grid = (B // Bt,)
    block_bytes = Bt * per_elem_bytes
    # TODO(synk): if a single-image slab still exceeds the v7x budget
    # (4*block_bytes > budget, e.g. C*HW > ~12 MiB), split HW over a second
    # "arbitrary" grid axis with a pooled-accumulator scratch + second scaling
    # pass instead of relying on the compiler to shrink pipelining.

    needed = 4 * block_bytes + 2 * weight_bytes + slack
    vmem_limit = int(min(max(needed, 16 << 20), budget))

    kernel = functools.partial(se_kernel, channels_last=channels_last)

    out_flat = pl.pallas_call(
        kernel,
        out_shape=jax.ShapeDtypeStruct((B,) + block_tail, x_nchw.dtype),
        grid_spec=pltpu.PrefetchScalarGridSpec(
            num_scalar_prefetch=0,
            grid=grid,
            in_specs=[
                pl.BlockSpec((Bt,) + block_tail, lambda b: (b, 0, 0)),  # x slab
                _resident_spec((C, Crp)),                               # w1^T
                _resident_spec((1, Crp)),                               # b1
                _resident_spec((Crp, C)),                               # w2^T
                _resident_spec((1, C)),                                 # b2
            ],
            out_specs=pl.BlockSpec((Bt,) + block_tail, lambda b: (b, 0, 0)),
        ),
        compiler_params=pltpu.CompilerParams(
            dimension_semantics=("parallel",),
            vmem_limit_bytes=vmem_limit,
        ),
    )(x_flat, w1t, b1r, w2t, b2r)

    if channels_last:
        return out_flat.reshape(B, H, W, C).transpose(0, 3, 1, 2)
    return out_flat.reshape(B, C, H, W)


def se_block_ref(x, w1, b1, w2, b2):
    """Pure-JAX reference matching the PyTorch forward."""
    y = jnp.mean(x, axis=(2, 3))                      # (B, C)
    y = jnp.maximum(y @ w1.T + b1, 0.0)               # (B, Cr)
    y = jax.nn.sigmoid(y @ w2.T + b2)                 # (B, C)
    return x * y[:, :, None, None]


# ----------------------------------------------------------------------------
# Test
# ----------------------------------------------------------------------------
if __name__ == "__main__":
    def make_case(key, B, C, H, W, r):
        Cr = max(1, C // r)
        kx, k1, k2, k3, k4 = jax.random.split(key, 5)
        x = jax.random.normal(kx, (B, C, H, W), dtype=jnp.float32)
        # PyTorch nn.Linear shapes: (out, in).
        w1 = jax.random.normal(k1, (Cr, C), dtype=jnp.float32) * 0.1
        b1 = jax.random.normal(k2, (Cr,), dtype=jnp.float32) * 0.1
        w2 = jax.random.normal(k3, (C, Cr), dtype=jnp.float32) * 0.1
        b2 = jax.random.normal(k4, (C,), dtype=jnp.float32) * 0.1
        return x, w1, b1, w2, b2

    key = jax.random.PRNGKey(0)
    k0, k1 = jax.random.split(key)

    # Case 1: lane-aligned spatial (HW = 256) -> NCHW fast path.
    args = make_case(k0, B=2, C=32, H=16, W=16, r=16)
    out = jax.block_until_ready(se_block(*args))
    ref = se_block_ref(*args)
    np.testing.assert_allclose(np.asarray(out), np.asarray(ref),
                               rtol=1e-5, atol=1e-5)

    # Case 2: real-SE-like shape (HW = 49 not lane-aligned, C = 128)
    # -> channels-last lane-dense path.
    args = make_case(k1, B=2, C=128, H=7, W=7, r=16)
    out = jax.block_until_ready(se_block(*args))
    ref = se_block_ref(*args)
    np.testing.assert_allclose(np.asarray(out), np.asarray(ref),
                               rtol=1e-5, atol=1e-5)

    print("KERNEL_OK")
</pallas_src>

<mosaic_0001>
module attributes {stable_mosaic.version = 11 : i64} {
  func.func @se_kernel(%arg0: i32, %arg1: memref<1x32x256xf32, #tpu.memory_space<vmem>>, %arg2: memref<32x128xf32, #tpu.memory_space<vmem>>, %arg3: memref<1x128xf32, #tpu.memory_space<vmem>>, %arg4: memref<128x32xf32, #tpu.memory_space<vmem>>, %arg5: memref<1x32xf32, #tpu.memory_space<vmem>>, %arg6: memref<1x32x256xf32, #tpu.memory_space<vmem>>) attributes {dimension_semantics = [#tpu.dimension_semantics<parallel>], iteration_bounds = array<i64: 2>, scalar_prefetch = 0 : i64, scratch_operands = 0 : i64, tpu.core_type = #tpu.core_type<tc>, window_params = [{transform_indices = @transform_0, window_bounds = array<i64: 1, 32, 256>}, {pipeline_mode = #tpu.pipeline_mode<synchronous>, transform_indices = @transform_1, window_bounds = array<i64: 32, 128>}, {pipeline_mode = #tpu.pipeline_mode<synchronous>, transform_indices = @transform_2, window_bounds = array<i64: 1, 128>}, {pipeline_mode = #tpu.pipeline_mode<synchronous>, transform_indices = @transform_3, window_bounds = array<i64: 128, 32>}, {pipeline_mode = #tpu.pipeline_mode<synchronous>, transform_indices = @transform_4, window_bounds = array<i64: 1, 32>}, {transform_indices = @transform_5, window_bounds = array<i64: 1, 32, 256>}]} {
    %c0 = arith.constant 0 : index
    %c0_0 = arith.constant 0 : index
    %c0_1 = arith.constant 0 : index
    %0 = vector.load %arg1[%c0, %c0_0, %c0_1] : memref<1x32x256xf32, #tpu.memory_space<vmem>>, vector<1x32x256xf32>
    %cst = arith.constant dense<0.000000e+00> : vector<1x32xf32>
    %1 = vector.multi_reduction <add>, %0, %cst [2] : vector<1x32x256xf32> to vector<1x32xf32>
    %cst_2 = arith.constant 2.560000e+02 : f32
    %2 = vector.broadcast %cst_2 : f32 to vector<1x32xf32>
    %3 = arith.divf %1, %2 : vector<1x32xf32>
    %c0_3 = arith.constant 0 : index
    %c0_4 = arith.constant 0 : index
    %4 = vector.load %arg2[%c0_3, %c0_4] : memref<32x128xf32, #tpu.memory_space<vmem>>, vector<32x128xf32>
    %cst_5 = arith.constant dense<0.000000e+00> : vector<1x128xf32>
    %5 = tpu.matmul %3, %4, %cst_5 {dimension_numbers = #tpu.dot_dimension_numbers<[1], [0], [0], [1], [0, 0, 1, 1], [], []>} : vector<1x32xf32>, vector<32x128xf32>, vector<1x128xf32> -> vector<1x128xf32>
    %c0_6 = arith.constant 0 : index
    %c0_7 = arith.constant 0 : index
    %6 = vector.load %arg3[%c0_6, %c0_7] : memref<1x128xf32, #tpu.memory_space<vmem>>, vector<1x128xf32>
    %7 = arith.addf %5, %6 : vector<1x128xf32>
    %cst_8 = arith.constant 0.000000e+00 : f32
    %8 = vector.broadcast %cst_8 : f32 to vector<1x128xf32>
    %9 = arith.maximumf %7, %8 : vector<1x128xf32>
    %c0_9 = arith.constant 0 : index
    %c0_10 = arith.constant 0 : index
    %10 = vector.load %arg4[%c0_9, %c0_10] : memref<128x32xf32, #tpu.memory_space<vmem>>, vector<128x32xf32>
    %cst_11 = arith.constant dense<0.000000e+00> : vector<1x32xf32>
    %11 = tpu.matmul %9, %10, %cst_11 {dimension_numbers = #tpu.dot_dimension_numbers<[1], [0], [0], [1], [0, 0, 1, 1], [], []>} : vector<1x128xf32>, vector<128x32xf32>, vector<1x32xf32> -> vector<1x32xf32>
    %c0_12 = arith.constant 0 : index
    %c0_13 = arith.constant 0 : index
    %12 = vector.load %arg5[%c0_12, %c0_13] : memref<1x32xf32, #tpu.memory_space<vmem>>, vector<1x32xf32>
    %13 = arith.addf %11, %12 : vector<1x32xf32>
    %14 = arith.negf %13 : vector<1x32xf32>
    %15 = math.exp %14 : vector<1x32xf32>
    %cst_14 = arith.constant 1.000000e+00 : f32
    %16 = vector.broadcast %cst_14 : f32 to vector<1x32xf32>
    %17 = arith.addf %16, %15 : vector<1x32xf32>
    %18 = arith.divf %16, %17 : vector<1x32xf32>
    %19 = vector.shape_cast %18 : vector<1x32xf32> to vector<1x32x1xf32>
    %20 = vector.broadcast %19 : vector<1x32x1xf32> to vector<1x32x256xf32>
    %21 = arith.mulf %0, %20 : vector<1x32x256xf32>
    %c0_15 = arith.constant 0 : index
    %c0_16 = arith.constant 0 : index
    %c0_17 = arith.constant 0 : index
    %22 = vector.load %arg6[%c0_15, %c0_16, %c0_17] : memref<1x32x256xf32, #tpu.memory_space<vmem>>, vector<1x32x256xf32>
    tpu.vector_store %arg6[%c0_15, %c0_16, %c0_17], %21 {strides = array<i32>} : memref<1x32x256xf32, #tpu.memory_space<vmem>>, vector<1x32x256xf32>,
    return
  }
  func.func @transform_0(%arg0: i32) -> (i32, i32, i32) {
    %c0_i32 = arith.constant 0 : i32
    %c0_i32_0 = arith.constant 0 : i32
    %c0_i32_1 = arith.constant 0 : i32
    return %arg0, %c0_i32, %c0_i32_0 : i32, i32, i32
  }
  func.func @transform_1(%arg0: i32) -> (i32, i32) {
    %c0_i32 = arith.constant 0 : i32
    %c0_i32_0 = arith.constant 0 : i32
    %c0_i32_1 = arith.constant 0 : i32
    return %c0_i32, %c0_i32_0 : i32, i32
  }
  func.func @transform_2(%arg0: i32) -> (i32, i32) {
    %c0_i32 = arith.constant 0 : i32
    %c0_i32_0 = arith.constant 0 : i32
    %c0_i32_1 = arith.constant 0 : i32
    return %c0_i32, %c0_i32_0 : i32, i32
  }
  func.func @transform_3(%arg0: i32) -> (i32, i32) {
    %c0_i32 = arith.constant 0 : i32
    %c0_i32_0 = arith.constant 0 : i32
    %c0_i32_1 = arith.constant 0 : i32
    return %c0_i32, %c0_i32_0 : i32, i32
  }
  func.func @transform_4(%arg0: i32) -> (i32, i32) {
    %c0_i32 = arith.constant 0 : i32
    %c0_i32_0 = arith.constant 0 : i32
    %c0_i32_1 = arith.constant 0 : i32
    return %c0_i32, %c0_i32_0 : i32, i32
  }
  func.func @transform_5(%arg0: i32) -> (i32, i32, i32) {
    %c0_i32 = arith.constant 0 : i32
    %c0_i32_0 = arith.constant 0 : i32
    %c0_i32_1 = arith.constant 0 : i32
    return %arg0, %c0_i32, %c0_i32_0 : i32, i32, i32
  }
}

</mosaic_0001>

<llo_original>
// kernel: tpu_custom_call.1
$region0: #{tpu_custom_call.1}
  #allocation0 [shape = 'u32[]', space=smem, size = 0x4, offset = 0x4, fixed_abs, tag = 'smem constant byte address 0x4 - core index']
  #allocation1 [shape = 'u32[144,128]{1,0:T(1,128)}', space=vmem, size = 0x12000, scoped, tag = 'internal scratch']
  %s0 = inlined_call_operand.vmem [shape: f32[2,32,256], index: 0, kind: input, shape index: {}]
  %s1 = inlined_call_operand.vmem [shape: f32[32,128], index: 1, kind: input, shape index: {}]
  %s2 = inlined_call_operand.vmem [shape: f32[1,128], index: 2, kind: input, shape index: {}]
  %s3 = inlined_call_operand.vmem [shape: f32[128,32], index: 3, kind: input, shape index: {}]
  %s4 = inlined_call_operand.vmem [shape: f32[1,32], index: 4, kind: input, shape index: {}]
  %s5 = inlined_call_operand.hbm [shape: f32[2,32,256], index: 5, kind: output, shape index: {}]
  %s6 = sld [smem:[#allocation0]]
  $region53: #{tpu_custom_call.1} parent=0
    _
  %s8 = ssub.s32 1, %s6
  %s9 = scalar_select 0, %s8, %s6
  $region1: #{tpu_custom_call.1} parent=0
    #allocation2 [shape = 'u8[65536]{0}', space=vmem, size = 0x10000, scoped, tag = 'output window, operand 0']
    #allocation3 [shape = 's32[2]{0}', space=sflag, size = 0x8, scoped, tag = 'scoped memory for tpu_custom_call.1']
    %10 = vsyncpa [#allocation3], 0
    %s11 = scalar_lea.sflag [#allocation3], 1
    %12 = vsyncpa %s11, 0
    loop: start=0, step=1, limit=4
    $region2: #{tpu_custom_call.1} parent=1 // loop_pre_header
      _
    $region3: #{tpu_custom_call.1} parent=1 // loop_header
      %s14 = sphi 0, %s18
      %p15 = scmp.ge.s32.totalorder %s14, 4
      %s24 = sphi 0, %s26
      %s27 = sphi 0, %s24
      %s28 = sphi 0, %s27
      %s44 = sphi 0, %s28
      %s48 = sphi 0, %s48
      %s50 = sphi 0, %s48
      %s51 = sphi 0, %s50
      %s65 = sphi 0, %s51
      %s69 = sphi 0, %s69
      %s71 = sphi 0, %s69
      %s72 = sphi 0, %s71
      %s86 = sphi 0, %s72
      %s90 = sphi 0, %s90
      %s92 = sphi 0, %s90
      %s93 = sphi 0, %s92
      %s107 = sphi 0, %s93
      %s111 = sphi 0, %s111
      %s113 = sphi 0, %s111
      %s114 = sphi 0, %s113
      %s128 = sphi 0, %s114
      %s134 = sphi 0, %s136
      %s137 = sphi 0, %s134
      %s138 = sphi 0, %s137
      %s154 = sphi 0, %s138
    $region4: #{tpu_custom_call.1} parent=1 // loop_header_branch
      %17 = sbr.rel (%p15) target = $region8
    $region5: #{tpu_custom_call.1} parent=1 // loop_body
      %s19 = ssub.s32 %s14, 1
      %s20 = ssub.s32 %s14, 2
      %s21 = sadd.s32 %s14, 1
      %s22 = ssub.s32 %s14, %s21
      %p23 = scmp.eq.s32.totalorder %s22, 0
      %s25 = sadd.s32 %s24, 1
      %s26 = scalar_select %p23, %s24, %s25
      %p29 = pneg %p23
      %p30 = scmp.eq.s32.totalorder %s14, 1
      %p31 = por %p29, %p30
      %p32 = scmp.ne.s32.totalorder %s24, %s27
      %p33 = scmp.eq.s32.totalorder %s14, 0
      %p34 = por %p32, %p33
      %p35 = scmp.ne.s32.totalorder %s24, %s27
      %p36 = scmp.eq.s32.totalorder %s19, 1
      %p37 = por %p35, %p36
      %p38 = scmp.ne.s32.totalorder %s27, %s28
      %p39 = scmp.eq.s32.totalorder %s19, 0
      %p40 = por %p38, %p39
      %p41 = scmp.ne.s32.totalorder %s27, %s28
      %p42 = scmp.eq.s32.totalorder %s20, 1
      %p43 = por %p41, %p42
      %p45 = scmp.ne.s32.totalorder %s28, %s44
      %p46 = scmp.eq.s32.totalorder %s20, 0
      %p47 = por %p45, %p46
      %s49 = sadd.s32 %s48, 1
      %p52 = scmp.eq.s32.totalorder %s14, 1
      %p53 = scmp.ne.s32.totalorder %s48, %s50
      %p54 = scmp.eq.s32.totalorder %s14, 0
      %p55 = por %p53, %p54
      %p56 = scmp.ne.s32.totalorder %s48, %s50
      %p57 = scmp.eq.s32.totalorder %s19, 1
      %p58 = por %p56, %p57
      %p59 = scmp.ne.s32.totalorder %s50, %s51
      %p60 = scmp.eq.s32.totalorder %s19, 0
      %p61 = por %p59, %p60
      %p62 = scmp.ne.s32.totalorder %s50, %s51
      %p63 = scmp.eq.s32.totalorder %s20, 1
      %p64 = por %p62, %p63
      %p66 = scmp.ne.s32.totalorder %s51, %s65
      %p67 = scmp.eq.s32.totalorder %s20, 0
      %p68 = por %p66, %p67
      %s70 = sadd.s32 %s69, 1
      %p73 = scmp.eq.s32.totalorder %s14, 1
      %p74 = scmp.ne.s32.totalorder %s69, %s71
      %p75 = scmp.eq.s32.totalorder %s14, 0
      %p76 = por %p74, %p75
      %p77 = scmp.ne.s32.totalorder %s69, %s71
      %p78 = scmp.eq.s32.totalorder %s19, 1
      %p79 = por %p77, %p78
      %p80 = scmp.ne.s32.totalorder %s71, %s72
      %p81 = scmp.eq.s32.totalorder %s19, 0
      %p82 = por %p80, %p81
      %p83 = scmp.ne.s32.totalorder %s71, %s72
      %p84 = scmp.eq.s32.totalorder %s20, 1
      %p85 = por %p83, %p84
      %p87 = scmp.ne.s32.totalorder %s72, %s86
      %p88 = scmp.eq.s32.totalorder %s20, 0
      %p89 = por %p87, %p88
      %s91 = sadd.s32 %s90, 1
      %p94 = scmp.eq.s32.totalorder %s14, 1
      %p95 = scmp.ne.s32.totalorder %s90, %s92
      %p96 = scmp.eq.s32.totalorder %s14, 0
      %p97 = por %p95, %p96
      %p98 = scmp.ne.s32.totalorder %s90, %s92
      %p99 = scmp.eq.s32.totalorder %s19, 1
      %p100 = por %p98, %p99
      %p101 = scmp.ne.s32.totalorder %s92, %s93
      %p102 = scmp.eq.s32.totalorder %s19, 0
      %p103 = por %p101, %p102
      %p104 = scmp.ne.s32.totalorder %s92, %s93
      %p105 = scmp.eq.s32.totalorder %s20, 1
      %p106 = por %p104, %p105
      %p108 = scmp.ne.s32.totalorder %s93, %s107
      %p109 = scmp.eq.s32.totalorder %s20, 0
      %p110 = por %p108, %p109
      %s112 = sadd.s32 %s111, 1
      %p115 = scmp.eq.s32.totalorder %s14, 1
      %p116 = scmp.ne.s32.totalorder %s111, %s113
      %p117 = scmp.eq.s32.totalorder %s14, 0
      %p118 = por %p116, %p117
      %p119 = scmp.ne.s32.totalorder %s111, %s113
      %p120 = scmp.eq.s32.totalorder %s19, 1
      %p121 = por %p119, %p120
      %p122 = scmp.ne.s32.totalorder %s113, %s114
      %p123 = scmp.eq.s32.totalorder %s19, 0
      %p124 = por %p122, %p123
      %p125 = scmp.ne.s32.totalorder %s113, %s114
      %p126 = scmp.eq.s32.totalorder %s20, 1
      %p127 = por %p125, %p126
      %p129 = scmp.ne.s32.totalorder %s114, %s128
      %p130 = scmp.eq.s32.totalorder %s20, 0
      %p131 = por %p129, %p130
      %s132 = ssub.s32 %s14, %s21
      %p133 = scmp.eq.s32.totalorder %s132, 0
      %s135 = sadd.s32 %s134, 1
      %s136 = scalar_select %p133, %s134, %s135
      %p139 = pneg %p133
      %p140 = scmp.eq.s32.totalorder %s14, 1
      %p141 = por %p139, %p140
      %p142 = scmp.ne.s32.totalorder %s134, %s137
      %p143 = scmp.eq.s32.totalorder %s14, 0
      %p144 = por %p142, %p143
      %p145 = scmp.ne.s32.totalorder %s134, %s137
      %p146 = scmp.eq.s32.totalorder %s19, 1
      %p147 = por %p145, %p146
      %p148 = scmp.ne.s32.totalorder %s137, %s138
      %p149 = scmp.eq.s32.totalorder %s19, 0
      %p150 = por %p148, %p149
      %p151 = scmp.ne.s32.totalorder %s137, %s138
      %p152 = scmp.eq.s32.totalorder %s20, 1
      %p153 = por %p151, %p152
      %p155 = scmp.ne.s32.totalorder %s138, %s154
      %p156 = scmp.eq.s32.totalorder %s20, 0
      %p157 = por %p155, %p156
      %p158 = scmp.le.s32.totalorder 1, %s14
      %p159 = scmp.lt.s32.totalorder %s14, 3
      %p160 = pnand %p158, %p159
      %p161 = pneg %p160
      // Predicated region
      $region9: #{tpu_custom_call.1} parent=5 // pred_check
        _
      $region10: #{tpu_custom_call.1} parent=5 // pred_check_branch
        %163 = sbr.rel (%p160) target = $region12
      $region11: #{tpu_custom_call.1} parent=5 // pred_region
        %s164 = ssub.s32 %s14, 1
        // Predicated region
        $region13: #{tpu_custom_call.1} parent=11 // pred_check
          %p165 = pneg %p61
        $region14: #{tpu_custom_call.1} parent=11 // pred_check_branch
          %167 = sbr.rel (%p165) target = $region16
        $region15: #{tpu_custom_call.1} parent=11 // pred_region
          _
        $region16: #{tpu_custom_call.1} parent=11 // pred_fallthru
          _
        // Predicated region
        $region17: #{tpu_custom_call.1} parent=11 // pred_check
          %p168 = pneg %p82
        $region18: #{tpu_custom_call.1} parent=11 // pred_check_branch
          %170 = sbr.rel (%p168) target = $region20
        $region19: #{tpu_custom_call.1} parent=11 // pred_region
          _
        $region20: #{tpu_custom_call.1} parent=11 // pred_fallthru
          _
        // Predicated region
        $region21: #{tpu_custom_call.1} parent=11 // pred_check
          %p171 = pneg %p103
        $region22: #{tpu_custom_call.1} parent=11 // pred_check_branch
          %173 = sbr.rel (%p171) target = $region24
        $region23: #{tpu_custom_call.1} parent=11 // pred_region
          _
        $region24: #{tpu_custom_call.1} parent=11 // pred_fallthru
          _
        // Predicated region
        $region25: #{tpu_custom_call.1} parent=11 // pred_check
          %p174 = pneg %p124
        $region26: #{tpu_custom_call.1} parent=11 // pred_check_branch
          %176 = sbr.rel (%p174) target = $region28
        $region27: #{tpu_custom_call.1} parent=11 // pred_region
          _
        $region28: #{tpu_custom_call.1} parent=11 // pred_fallthru
          _
      $region12: #{tpu_custom_call.1} parent=5 // pred_fallthru
        _
      %p177 = scmp.lt.s32.totalorder %s14, 2
      // Predicated region
      $region29: #{tpu_custom_call.1} parent=5 // pred_check
        %p178 = pneg %p177
      $region30: #{tpu_custom_call.1} parent=5 // pred_check_branch
        %180 = sbr.rel (%p178) target = $region32
      $region31: #{tpu_custom_call.1} parent=5 // pred_region
        // Predicated region
        $region33: #{tpu_custom_call.1} parent=31 // pred_check
          %p181 = pneg %p34
        $region34: #{tpu_custom_call.1} parent=31 // pred_check_branch
          %183 = sbr.rel (%p181) target = $region36
        $region35: #{tpu_custom_call.1} parent=31 // pred_region
          %p184 = scmp.lt.s32.totalorder %s14, 1
          %s185 = scalar_select %p184, %s14, 1
          %s186 = smul.addr %s185, 8
          %s187 = smul.addr %s186, 8
          %s188 = scalar_lea.vmem %s0, %s187
        $region36: #{tpu_custom_call.1} parent=31 // pred_fallthru
          _
      $region32: #{tpu_custom_call.1} parent=5 // pred_fallthru
        _
      %p189 = scmp.le.s32.totalorder 1, %s14
      %p190 = scmp.lt.s32.totalorder %s14, 3
      %p191 = pnand %p189, %p190
      %p192 = pneg %p191
      // Predicated region
      $region37: #{tpu_custom_call.1} parent=5 // pred_check
        _
      $region38: #{tpu_custom_call.1} parent=5 // pred_check_branch
        %194 = sbr.rel (%p191) target = $region40
      $region39: #{tpu_custom_call.1} parent=5 // pred_region
        %s195 = ssub.s32 %s14, 1
        %p196 = scmp.lt.s32.totalorder %s19, 1
        %s197 = scalar_select %p196, %s19, 1
        %s198 = smul.addr %s197, 8
        %s199 = smul.addr %s198, 8
        %s200 = scalar_lea.vmem %s0, %s199
        %p201 = pneg %p40
        %p202 = pneg %p37
        %p203 = pneg %p61
        %p204 = pneg %p58
        %p205 = pneg %p82
        %p206 = pneg %p79
        %p207 = pneg %p103
        %p208 = pneg %p100
        %p209 = pneg %p124
        %p210 = pneg %p121
        %p211 = pneg %p150
        %p212 = pneg %p147
        %s213 = sand.u32 %s137, 1
        %s214 = scalar_lea.sflag [#allocation3], %s213
        %s215 = sand.u32 %s137, 1
        %s216 = smul.addr %s215, 64
        %s217 = scalar_lea.vmem [#allocation2], %s216
        %p218 = scmp.lt.s32.totalorder %s19, 1
        %s219 = scalar_select %p218, %s19, 1
        %s220 = smul.addr %s219, 8
        %s221 = smul.addr %s220, 8
        %s222 = scalar_lea.vmem %s0, %s221
        %v223 = vld [vmem:[%s222] sm:$0xff]
        %v224 = vld [vmem:[%s222 + $0x8] sm:$0xff]
        %v225 = vld [vmem:[%s222 + $0x10] sm:$0xff]
        %v226 = vld [vmem:[%s222 + $0x18] sm:$0xff]
        %v227 = vld [vmem:[%s222 + $0x20] sm:$0xff]
        %v228 = vld [vmem:[%s222 + $0x28] sm:$0xff]
        %v229 = vld [vmem:[%s222 + $0x30] sm:$0xff]
        %v230 = vld [vmem:[%s222 + $0x38] sm:$0xff]
        %v231 = vadd.f32 %v223, %v224
        %232 = vadd.xlane.f32.xlu0 %v231
        %v233 = vpop.xlane.xlu0 %232
        %v234 = vadd.f32 %v225, %v226
        %235 = vadd.xlane.f32.xlu0 %v234
        %v236 = vpop.xlane.xlu0 %235
        %v237 = vadd.f32 %v227, %v228
        %238 = vadd.xlane.f32.xlu0 %v237
        %v239 = vpop.xlane.xlu0 %238
        %v240 = vadd.f32 %v229, %v230
        %241 = vadd.xlane.f32.xlu0 %v240
        %v242 = vpop.xlane.xlu0 %241
        %v243 = vrcp.pop 256.0
        %v244 = vmul.f32 %v233, %v243
        %v245 = vmul.f32 %v236, %v243
        %v246 = vmul.f32 %v239, %v243
        %v247 = vmul.f32 %v242, %v243
        %v248 = vld [vmem:[%s1] sm:$0xff]
        %v249 = vld [vmem:[%s1 + $0x8] sm:$0xff]
        %v250 = vld [vmem:[%s1 + $0x10] sm:$0xff]
        %v251 = vld [vmem:[%s1 + $0x18] sm:$0xff]
        %v252 = vld [vmem:[%s2] sm:$0x1]
        %v257 = vlaneseq
        %v258 = vand.u32 %v257, 127
        %v259 = vlaneseq
        %v260 = vshrl.u32 %v259, 7
        %v261 = vsub.s32 %v258, %v260
        %v262 = vrot.slane %v244, %v261
        %v263 = vadd.s32 %v258, 4294967288
        %v264 = vlaneseq
        %v265 = vshrl.u32 %v264, 7
        %v266 = vsub.s32 %v263, %v265
        %v267 = vrot.slane %v245, %v266
        %vm268 = vcmask 130112
        %v269 = vsel %vm268, %v267, %v262
        %v270 = vadd.s32 %v258, 4294967280
        %v271 = vlaneseq
        %v272 = vshrl.u32 %v271, 7
        %v273 = vsub.s32 %v270, %v272
        %v274 = vrot.slane %v246, %v273
        %vm275 = vcmask 195712
        %v276 = vsel %vm275, %v274, %v269
        %v277 = vadd.s32 %v258, 4294967272
        %v278 = vlaneseq
        %v279 = vshrl.u32 %v278, 7
        %v280 = vsub.s32 %v277, %v279
        %v281 = vrot.slane %v247, %v280
        %vm282 = vcmask 261312
        %v283 = vsel %vm282, %v281, %v276
        %vm284 = vcmask 261120
        %v285 = vsel %vm284, %v283, 0
        %287 = vmatprep.subr.mxu0 0.0
        %288 = vmatpush1.msra.mxu0 %v248
        %289 = vmatprep.subr.mxu0 0.0
        %290 = vmatpush1.msra.mxu0 %v249
        %291 = vmatprep.subr.mxu0 0.0
        %292 = vmatpush1.msra.mxu0 %v250
        %293 = vmatprep.subr.mxu0 0.0
        %294 = vmatpush1.msra.mxu0 %v251
        %295 = vmatprep.subr.mxu0 0.0
        %296 = vmatpush1.msra.mxu0 0.0
        %297 = vmatprep.subr.mxu0 0.0
        %298 = vmatpush1.msra.mxu0 0.0
        %299 = vmatprep.subr.mxu0 0.0
        %300 = vmatpush1.msra.mxu0 0.0
        %301 = vmatprep.subr.mxu0 0.0
        %302 = vmatpush1.msra.mxu0 0.0
        %303 = vmatprep.subr.mxu0 0.0
        %304 = vmatpush1.msra.mxu0 0.0
        %305 = vmatprep.subr.mxu0 0.0
        %306 = vmatpush1.msra.mxu0 0.0
        %307 = vmatprep.subr.mxu0 0.0
        %308 = vmatpush1.msra.mxu0 0.0
        %309 = vmatprep.subr.mxu0 0.0
        %310 = vmatpush1.msra.mxu0 0.0
        %311 = vmatprep.subr.mxu0 0.0
        %312 = vmatpush1.msra.mxu0 0.0
        %313 = vmatprep.subr.mxu0 0.0
        %314 = vmatpush1.msra.mxu0 0.0
        %315 = vmatprep.subr.mxu0 0.0
        %316 = vmatpush1.msra.mxu0 0.0
        %317 = vmatprep.subr.mxu0 0.0
        %318 = vmatpush1.msra.mxu0 0.0
        %319 = vmatprep.subr.mxu0 0.0
        %320 = vmatpush1.msra.mxu0 0.0
        %321 = vmatprep.subr.mxu0 0.0
        %322 = vmatpush1.msra.mxu0 0.0
        %323 = vmatprep.subr.mxu0 0.0
        %324 = vmatpush1.msra.mxu0 0.0
        %325 = vmatprep.subr.mxu0 0.0
        %326 = vmatpush1.msra.mxu0 0.0
        %327 = vmatprep.subr.mxu0 0.0
        %328 = vmatpush1.msra.mxu0 0.0
        %329 = vmatprep.subr.mxu0 0.0
        %330 = vmatpush1.msra.mxu0 0.0
        %331 = vmatprep.subr.mxu0 0.0
        %332 = vmatpush1.msra.mxu0 0.0
        %333 = vmatprep.subr.mxu0 0.0
        %334 = vmatpush1.msra.mxu0 0.0
        %335 = vmatprep.subr.mxu0 0.0
        %336 = vmatpush1.msra.mxu0 0.0
        %337 = vmatprep.subr.mxu0 0.0
        %338 = vmatpush1.msra.mxu0 0.0
        %339 = vmatprep.subr.mxu0 0.0
        %340 = vmatpush1.msra.mxu0 0.0
        %341 = vmatprep.subr.mxu0 0.0
        %342 = vmatpush1.msra.mxu0 0.0
        %343 = vmatprep.subr.mxu0 0.0
        %344 = vmatpush1.msra.mxu0 0.0
        %345 = vmatprep.subr.mxu0 0.0
        %346 = vmatpush1.msra.mxu0 0.0
        %347 = vmatprep.subr.mxu0 0.0
        %348 = vmatpush1.msra.mxu0 0.0
        %349 = vmatprep.subr.mxu0 0.0
        %350 = vmatpush1.msra.mxu0 0.0
        %351 = vmatprep.mubr.f32.mxu0 0.0
        %352 = vmatmul.mubr.f32.gmra.mrb[0].mxu0 %v285
        %v353 = vpop.f32.mrb[0].mxu0
        %v354 = vadd.f32 %v252, %v353
        %v355 = vpop.f32.mrb[0].mxu0
        %356 = vdwg.mxu0
        %v357 = vmax.f32 %v354, 0.0
        %v358 = vld [vmem:[%s3] sm:$0xff]
        %v359 = vld [vmem:[%s3 + $0x8] sm:$0xff]
        %v360 = vld [vmem:[%s3 + $0x10] sm:$0xff]
        %v361 = vld [vmem:[%s3 + $0x18] sm:$0xff]
        %v362 = vld [vmem:[%s3 + $0x20] sm:$0xff]
        %v363 = vld [vmem:[%s3 + $0x28] sm:$0xff]
        %v364 = vld [vmem:[%s3 + $0x30] sm:$0xff]
        %v365 = vld [vmem:[%s3 + $0x38] sm:$0xff]
        %v366 = vld [vmem:[%s3 + $0x40] sm:$0xff]
        %v367 = vld [vmem:[%s3 + $0x48] sm:$0xff]
        %v368 = vld [vmem:[%s3 + $0x50] sm:$0xff]
        %v369 = vld [vmem:[%s3 + $0x58] sm:$0xff]
        %v370 = vld [vmem:[%s3 + $0x60] sm:$0xff]
        %v371 = vld [vmem:[%s3 + $0x68] sm:$0xff]
        %v372 = vld [vmem:[%s3 + $0x70] sm:$0xff]
        %v373 = vld [vmem:[%s3 + $0x78] sm:$0xff]
        %v374 = vld [vmem:[%s4] sm:$0x1]
        %375 = vmatprep.subr.mxu0 0.0
        %376 = vmatpush1.msra.mxu0 %v358
        %377 = vmatprep.subr.mxu0 0.0
        %378 = vmatpush1.msra.mxu0 %v359
        %379 = vmatprep.subr.mxu0 0.0
        %380 = vmatpush1.msra.mxu0 %v360
        %381 = vmatprep.subr.mxu0 0.0
        %382 = vmatpush1.msra.mxu0 %v361
        %383 = vmatprep.subr.mxu0 0.0
        %384 = vmatpush1.msra.mxu0 %v362
        %385 = vmatprep.subr.mxu0 0.0
        %386 = vmatpush1.msra.mxu0 %v363
        %387 = vmatprep.subr.mxu0 0.0
        %388 = vmatpush1.msra.mxu0 %v364
        %389 = vmatprep.subr.mxu0 0.0
        %390 = vmatpush1.msra.mxu0 %v365
        %391 = vmatprep.subr.mxu0 0.0
        %392 = vmatpush1.msra.mxu0 %v366
        %393 = vmatprep.subr.mxu0 0.0
        %394 = vmatpush1.msra.mxu0 %v367
        %395 = vmatprep.subr.mxu0 0.0
        %396 = vmatpush1.msra.mxu0 %v368
        %397 = vmatprep.subr.mxu0 0.0
        %398 = vmatpush1.msra.mxu0 %v369
        %399 = vmatprep.subr.mxu0 0.0
        %400 = vmatpush1.msra.mxu0 %v370
        %401 = vmatprep.subr.mxu0 0.0
        %402 = vmatpush1.msra.mxu0 %v371
        %403 = vmatprep.subr.mxu0 0.0
        %404 = vmatpush1.msra.mxu0 %v372
        %405 = vmatprep.subr.mxu0 0.0
        %406 = vmatpush1.msra.mxu0 %v373
        %407 = vmatprep.subr.mxu0 0.0
        %408 = vmatpush1.msra.mxu0 0.0
        %409 = vmatprep.subr.mxu0 0.0
        %410 = vmatpush1.msra.mxu0 0.0
        %411 = vmatprep.subr.mxu0 0.0
        %412 = vmatpush1.msra.mxu0 0.0
        %413 = vmatprep.subr.mxu0 0.0
        %414 = vmatpush1.msra.mxu0 0.0
        %415 = vmatprep.subr.mxu0 0.0
        %416 = vmatpush1.msra.mxu0 0.0
        %417 = vmatprep.subr.mxu0 0.0
        %418 = vmatpush1.msra.mxu0 0.0
        %419 = vmatprep.subr.mxu0 0.0
        %420 = vmatpush1.msra.mxu0 0.0
        %421 = vmatprep.subr.mxu0 0.0
        %422 = vmatpush1.msra.mxu0 0.0
        %423 = vmatprep.subr.mxu0 0.0
        %424 = vmatpush1.msra.mxu0 0.0
        %425 = vmatprep.subr.mxu0 0.0
        %426 = vmatpush1.msra.mxu0 0.0
        %427 = vmatprep.subr.mxu0 0.0
        %428 = vmatpush1.msra.mxu0 0.0
        %429 = vmatprep.subr.mxu0 0.0
        %430 = vmatpush1.msra.mxu0 0.0
        %431 = vmatprep.subr.mxu0 0.0
        %432 = vmatpush1.msra.mxu0 0.0
        %433 = vmatprep.subr.mxu0 0.0
        %434 = vmatpush1.msra.mxu0 0.0
        %435 = vmatprep.subr.mxu0 0.0
        %436 = vmatpush1.msra.mxu0 0.0
        %437 = vmatprep.subr.mxu0 0.0
        %438 = vmatpush1.msra.mxu0 0.0
        %439 = vmatprep.mubr.f32.mxu0 0.0
        %440 = vmatmul.mubr.f32.gmra.mrb[0].mxu0 %v357
        %v441 = vpop.f32.mrb[0].mxu0
        %v442 = vadd.f32 %v374, %v441
        %v443 = vpop.f32.mrb[0].mxu0
        %444 = vdwg.mxu0
        %v445 = vxor.u32 %v442, 2147483648
        %v446 = vmul.f32 %v445, 1.442695
        %v447 = vpow.pop %v446
        %v448 = vadd.f32 %v447, 1.0
        %v449 = vrcp.pop %v448
        %v450 = vmul.f32 1.0, %v449
        %v451 = vlaneseq
        %v452 = vshrl.u32 %v451, 7
        %v453 = vsub.s32 0, %v452
        %v454 = vrot.slane %v450, %v453
        %456 = vbcast.lane.b32.xlu0 %v454, 256
        %v457 = vpop.permute.xlu0 %456
        %s459 = sor.u32 256, 8
        %460 = vbcast.lane.b32.xlu0 %v454, %s459
        %v461 = vpop.permute.xlu0 %460
        %s463 = sor.u32 256, 16
        %464 = vbcast.lane.b32.xlu0 %v454, %s463
        %v465 = vpop.permute.xlu0 %464
        %s467 = sor.u32 256, 24
        %468 = vbcast.lane.b32.xlu0 %v454, %s467
        %v469 = vpop.permute.xlu0 %468
        %v470 = vmul.f32 %v223, %v457
        %v471 = vmul.f32 %v224, %v457
        %v472 = vmul.f32 %v225, %v461
        %v473 = vmul.f32 %v226, %v461
        %v474 = vmul.f32 %v227, %v465
        %v475 = vmul.f32 %v228, %v465
        %v476 = vmul.f32 %v229, %v469
        %v477 = vmul.f32 %v230, %v469
        %478 = vst [vmem:[%s217] sm:$0xff] %v470
        %479 = vst [vmem:[%s217 + $0x8] sm:$0xff] %v471
        %480 = vst [vmem:[%s217 + $0x10] sm:$0xff] %v472
        %481 = vst [vmem:[%s217 + $0x18] sm:$0xff] %v473
        %482 = vst [vmem:[%s217 + $0x20] sm:$0xff] %v474
        %483 = vst [vmem:[%s217 + $0x28] sm:$0xff] %v475
        %484 = vst [vmem:[%s217 + $0x30] sm:$0xff] %v476
        %485 = vst [vmem:[%s217 + $0x38] sm:$0xff] %v477
        %s486 = sand.u32 %s137, 1
        %s487 = scalar_lea.sflag [#allocation3], %s486
        %s488 = sand.u32 %s137, 1
        %s489 = smul.addr %s488, 64
        %s490 = scalar_lea.vmem [#allocation2], %s489
        // Predicated region
        $region41: #{tpu_custom_call.1} parent=39 // pred_check
          %p491 = pneg %p147
        $region42: #{tpu_custom_call.1} parent=39 // pred_check_branch
          %493 = sbr.rel (%p491) target = $region44
        $region43: #{tpu_custom_call.1} parent=39 // pred_region
          %s495 = ssub.s32 1024, 1024
          %496 = vsyncadd %s487, %s495
          %s497 = smul.addr %s19, 8
          %s498 = smul.addr %s497, 128
          %s499 = scalar_lea.hbm %s5, %s498
          %s500 = sshll.u32 %s490, 4
          %s501 = int_to_ptr.vmem [resolvable:$true] %s500
          %506 = dma.vmem_to_hbm [thread:$0]  %s501, 1024, %s499, %s487, 256, 256, 16
        $region44: #{tpu_custom_call.1} parent=39 // pred_fallthru
          _
      $region40: #{tpu_custom_call.1} parent=5 // pred_fallthru
        _
      %p507 = scmp.le.s32.totalorder 2, %s14
      // Predicated region
      $region45: #{tpu_custom_call.1} parent=5 // pred_check
        %p508 = pneg %p507
      $region46: #{tpu_custom_call.1} parent=5 // pred_check_branch
        %510 = sbr.rel (%p508) target = $region48
      $region47: #{tpu_custom_call.1} parent=5 // pred_region
        %s511 = ssub.s32 %s14, 2
        // Predicated region
        $region49: #{tpu_custom_call.1} parent=47 // pred_check
          %p512 = pneg %p153
        $region50: #{tpu_custom_call.1} parent=47 // pred_check_branch
          %514 = sbr.rel (%p512) target = $region52
        $region51: #{tpu_custom_call.1} parent=47 // pred_region
          %s515 = sand.u32 %s138, 1
          %s516 = scalar_lea.sflag [#allocation3], %s515
          %s517 = sand.u32 %s138, 1
          %s518 = smul.addr %s517, 64
          %s519 = scalar_lea.vmem [#allocation2], %s518
          %520 = dma.done %s516, 1024
        $region52: #{tpu_custom_call.1} parent=47 // pred_fallthru
          _
      $region48: #{tpu_custom_call.1} parent=5 // pred_fallthru
        _
    $region6: #{tpu_custom_call.1} parent=1 // loop_footer
      %s18 = sadd.s32 1, %s14
    $region7: #{tpu_custom_call.1} parent=1 // loop_footer_branch
      %13 = sbr.rel target = $region3
    $region8: #{tpu_custom_call.1} parent=1 // loop_exit
      _
    %521 = vsyncpa [#allocation3], 1
    %s522 = scalar_lea.sflag [#allocation3], 1
    %523 = vsyncpa %s522, 1

</llo_original>
